<compile_context>
chip_gen: v7x
topology: tpu7x:2x2x1
jax: 0.10.0
libtpu: 0.0.40
codegen_flags: <defaults>
</compile_context>

<pallas_src>
import functools

import jax
import jax.numpy as jnp
from jax.experimental import pallas as pl
from jax.experimental.pallas import tpu as pltpu

_LANE = 128


# ----------------------------- Pallas kernels -------------------------------

def _pool_global_kernel(x_ref, r_ref, w1_ref, b1_ref, w2_ref, b2_ref,
                        glob_ref, acc_ref, *, inv_hw):
    """Pass 1: accumulate sum(x+r) over HW tiles (f32); on the last HW tile run
    the tiny global-attention MLP and emit its per-batch [C] logits broadcast
    across 128 lanes."""
    hw = pl.program_id(1)

    @pl.when(hw == 0)
    def _init():
        acc_ref[...] = jnp.zeros_like(acc_ref)

    a = x_ref[...].astype(jnp.float32) + r_ref[...].astype(jnp.float32)
    acc_ref[...] += jnp.sum(a, axis=-1, keepdims=True)            # [Bt, C, 1]

    @pl.when(hw == pl.num_programs(1) - 1)
    def _finalize():
        w1 = w1_ref[...]                                           # [Ci, C] f32
        b1 = b1_ref[...]                                           # [Ci, 1]
        w2 = w2_ref[...]                                           # [C, Ci]
        b2 = b2_ref[...]                                           # [C, 1]
        lanes = glob_ref.shape[-1]
        for b in range(acc_ref.shape[0]):                          # Bt static
            pooled = acc_ref[b] * inv_hw                           # [C, 1] f32
            pooled_b = jnp.broadcast_to(pooled, (pooled.shape[0], lanes))
            h = jnp.dot(w1, pooled_b, preferred_element_type=jnp.float32) + b1
            h = jnp.maximum(h, 0.0)
            g = jnp.dot(w2, h, preferred_element_type=jnp.float32) + b2
            glob_ref[b] = g                                        # [C, 128]


def _fuse_kernel(x_ref, r_ref, glob_ref, w1_ref, b1_ref, w2_ref, b2_ref,
                 out_ref):
    """Pass 2: local-attention 1x1 convs (BN folded), sigmoid gate + residual
    fusion, fully tiled over batch blocks and HW tiles."""
    w1 = w1_ref[...]                                               # [Ci, C]
    b1 = b1_ref[...]                                               # [Ci, 1] f32
    w2 = w2_ref[...]                                               # [C, Ci]
    b2 = b2_ref[...]                                               # [C, 1]  f32
    for b in range(x_ref.shape[0]):                                # Bt static
        x = x_ref[b]                                               # [C, THW]
        r = r_ref[b]
        a = x + r
        h = jnp.dot(w1, a, preferred_element_type=jnp.float32) + b1
        h = jnp.maximum(h, 0.0)
        local = jnp.dot(w2, h.astype(w2.dtype),
                        preferred_element_type=jnp.float32) + b2   # [C, THW]
        logits = local + glob_ref[b, :, 0:1]                       # f32
        gate2 = 2.0 * jax.nn.sigmoid(logits)                       # exp on EUP
        xf = x.astype(jnp.float32)
        rf = r.astype(jnp.float32)
        # 2*x*s + 2*r*(1-s) == 2*r + (x - r) * (2*s)
        out_ref[b] = (2.0 * rf + (xf - rf) * gate2).astype(out_ref.dtype)


# ------------------------------ JAX wrapper ---------------------------------

def _fold_conv_bn(conv_w, conv_b, gamma, beta, mean, var, eps):
    """Fold eval-mode BatchNorm2d into a 1x1 Conv2d -> (W [Cout,Cin], b [Cout])."""
    w = conv_w.reshape(conv_w.shape[0], conv_w.shape[1]).astype(jnp.float32)
    scale = gamma.astype(jnp.float32) / jnp.sqrt(var.astype(jnp.float32) + eps)
    w_eff = w * scale[:, None]
    b_eff = ((conv_b.astype(jnp.float32) - mean.astype(jnp.float32)) * scale
             + beta.astype(jnp.float32))
    return w_eff, b_eff


def clap_audio_aff_block(hidden_states, residual, params, *, bn_eps=1e-5,
                         hw_tile=2048, batch_tile=None):
    """Forward of ClapAudioAFFBlock (eval mode). hidden/residual: [B, C, H, W]."""
    B, C, H, W = hidden_states.shape
    dtype = hidden_states.dtype
    residual = residual.astype(dtype)
    HW = H * W

    w1l, b1l = _fold_conv_bn(params["local_conv1_w"], params["local_conv1_b"],
                             params["local_bn1_gamma"], params["local_bn1_beta"],
                             params["local_bn1_mean"], params["local_bn1_var"], bn_eps)
    w2l, b2l = _fold_conv_bn(params["local_conv2_w"], params["local_conv2_b"],
                             params["local_bn2_gamma"], params["local_bn2_beta"],
                             params["local_bn2_mean"], params["local_bn2_var"], bn_eps)
    w1g, b1g = _fold_conv_bn(params["global_conv1_w"], params["global_conv1_b"],
                             params["global_bn1_gamma"], params["global_bn1_beta"],
                             params["global_bn1_mean"], params["global_bn1_var"], bn_eps)
    w2g, b2g = _fold_conv_bn(params["global_conv2_w"], params["global_conv2_b"],
                             params["global_bn2_gamma"], params["global_bn2_beta"],
                             params["global_bn2_mean"], params["global_bn2_var"], bn_eps)
    Ci = w1l.shape[0]

    # Local-branch matmul weights in the compute dtype (bf16 stays bf16); all
    # biases stay f32 and are added after the f32 accumulation.  The global
    # branch is a once-per-batch matvec -> keep it entirely in f32.
    w_dtype = dtype if jnp.dtype(dtype).itemsize < 4 else jnp.float32
    w1l_c = w1l.astype(w_dtype)                      # [Ci, C]
    w2l_c = w2l.astype(w_dtype)                      # [C, Ci]
    b1l_c = b1l.reshape(Ci, 1)
    b2l_c = b2l.reshape(C, 1)
    w1g_c = w1g                                      # [Ci, C] f32
    w2g_c = w2g                                      # [C, Ci] f32
    b1g_c = b1g.reshape(Ci, 1)
    b2g_c = b2g.reshape(C, 1)

    itemsize = jnp.dtype(dtype).itemsize

    # ---- lane-dense HW tiling (multiple of 128, bounded VMEM working set) ---
    thw = min(int(hw_tile), pl.cdiv(HW, _LANE) * _LANE)
    thw = max(_LANE, (thw // _LANE) * _LANE)
    # keep the double-buffered x/r/out working set within ~12 MiB (v5e default
    # scoped VMEM is 16 MiB; v7x physical VMEM is only 64 MiB)
    while thw > _LANE and 6 * C * thw * itemsize > 12 * 1024 * 1024:
        thw -= _LANE
    hw_pad = pl.cdiv(HW, thw) * thw
    n_hw = hw_pad // thw

    # ---- block several batch elements per grid step when slabs are tiny -----
    if batch_tile is None:
        target_elems = 64 * 1024          # amortize ~0.35us fixed cost / step
        batch_tile = max(1, min(B, target_elems // max(1, C * thw)))
    batch_tile = int(batch_tile)
    while B % batch_tile:
        batch_tile -= 1
    nb = B // batch_tile

    # ---- explicit scoped-VMEM budget (double-buffered operands + headroom) --
    blk_bytes = batch_tile * C * thw * itemsize
    glob_bytes = batch_tile * C * _LANE * 4
    vmem_limit = int(min(max(2 * (3 * blk_bytes + glob_bytes) + (2 << 20),
                             8 << 20), 64 << 20))

    x3 = hidden_states.reshape(B, C, HW)
    r3 = residual.reshape(B, C, HW)
    if hw_pad != HW:
        pad = ((0, 0), (0, 0), (0, hw_pad - HW))
        x3 = jnp.pad(x3, pad)                     # zeros: don't perturb the sum
        r3 = jnp.pad(r3, pad)

    xr_spec = pl.BlockSpec((batch_tile, C, thw), lambda b, s: (b, 0, s))
    glob_spec = pl.BlockSpec((batch_tile, C, _LANE), lambda b, s: (b, 0, 0))
    const2d = lambda b, s: (0, 0)

    # ---------------- pass 1: pooled global-attention logits -----------------
    glob = pl.pallas_call(
        functools.partial(_pool_global_kernel, inv_hw=float(1.0 / HW)),
        out_shape=jax.ShapeDtypeStruct((B, C, _LANE), jnp.float32),
        grid_spec=pltpu.PrefetchScalarGridSpec(
            num_scalar_prefetch=0,
            grid=(nb, n_hw),
            in_specs=[
                xr_spec, xr_spec,
                pl.BlockSpec((Ci, C), const2d),
                pl.BlockSpec((Ci, 1), const2d),
                pl.BlockSpec((C, Ci), const2d),
                pl.BlockSpec((C, 1), const2d),
            ],
            out_specs=glob_spec,
            scratch_shapes=[pltpu.VMEM((batch_tile, C, 1), jnp.float32)],
        ),
        compiler_params=pltpu.CompilerParams(
            dimension_semantics=("parallel", "arbitrary"),
            vmem_limit_bytes=vmem_limit),
    )(x3, r3, w1g_c, b1g_c, w2g_c, b2g_c)

    # ---------------- pass 2: local attention + gating + fusion --------------
    out = pl.pallas_call(
        _fuse_kernel,
        out_shape=jax.ShapeDtypeStruct((B, C, hw_pad), dtype),
        grid_spec=pltpu.PrefetchScalarGridSpec(
            num_scalar_prefetch=0,
            grid=(nb, n_hw),
            in_specs=[
                xr_spec, xr_spec, glob_spec,
                pl.BlockSpec((Ci, C), const2d),
                pl.BlockSpec((Ci, 1), const2d),
                pl.BlockSpec((C, Ci), const2d),
                pl.BlockSpec((C, 1), const2d),
            ],
            out_specs=xr_spec,
        ),
        compiler_params=pltpu.CompilerParams(
            dimension_semantics=("parallel", "parallel"),
            vmem_limit_bytes=vmem_limit),
    )(x3, r3, glob, w1l_c, b1l_c, w2l_c, b2l_c)

    if hw_pad != HW:
        out = out[:, :, :HW]
    return out.reshape(B, C, H, W)


# ------------------------------ pure-JAX ref --------------------------------

def _reference(hidden_states, residual, p, bn_eps):
    def conv1x1(x, w, b):
        return jnp.einsum("oc,bchw->bohw", w[:, :, 0, 0], x) + b[None, :, None, None]

    def bn(x, gamma, beta, mean, var):
        return ((x - mean[None, :, None, None])
                / jnp.sqrt(var[None, :, None, None] + bn_eps)
                * gamma[None, :, None, None] + beta[None, :, None, None])

    a = hidden_states + residual

    l = conv1x1(a, p["local_conv1_w"], p["local_conv1_b"])
    l = bn(l, p["local_bn1_gamma"], p["local_bn1_beta"],
           p["local_bn1_mean"], p["local_bn1_var"])
    l = jnp.maximum(l, 0.0)
    l = conv1x1(l, p["local_conv2_w"], p["local_conv2_b"])
    l = bn(l, p["local_bn2_gamma"], p["local_bn2_beta"],
           p["local_bn2_mean"], p["local_bn2_var"])

    g = jnp.mean(a, axis=(2, 3), keepdims=True)
    g = conv1x1(g, p["global_conv1_w"], p["global_conv1_b"])
    g = bn(g, p["global_bn1_gamma"], p["global_bn1_beta"],
           p["global_bn1_mean"], p["global_bn1_var"])
    g = jnp.maximum(g, 0.0)
    g = conv1x1(g, p["global_conv2_w"], p["global_conv2_b"])
    g = bn(g, p["global_bn2_gamma"], p["global_bn2_beta"],
           p["global_bn2_mean"], p["global_bn2_var"])

    fused = jax.nn.sigmoid(l + g)
    return 2.0 * hidden_states * fused + 2.0 * residual * (1.0 - fused)


# ---------------------------------- main -------------------------------------

if __name__ == "__main__":
    bn_eps = 1e-5

    def make_params(key, C, Ci):
        keys = jax.random.split(key, 24)
        it = iter(keys)

        def nrm(shape, scale=0.1):
            return scale * jax.random.normal(next(it), shape, jnp.float32)

        def pos(shape):
            return 1.0 + 0.1 * jnp.abs(jax.random.normal(next(it), shape, jnp.float32))

        p = {}
        for prefix in ("local", "global"):
            p[f"{prefix}_conv1_w"] = nrm((Ci, C, 1, 1))
            p[f"{prefix}_conv1_b"] = nrm((Ci,))
            p[f"{prefix}_bn1_gamma"] = 1.0 + nrm((Ci,))
            p[f"{prefix}_bn1_beta"] = nrm((Ci,))
            p[f"{prefix}_bn1_mean"] = nrm((Ci,))
            p[f"{prefix}_bn1_var"] = pos((Ci,))
            p[f"{prefix}_conv2_w"] = nrm((C, Ci, 1, 1))
            p[f"{prefix}_conv2_b"] = nrm((C,))
            p[f"{prefix}_bn2_gamma"] = 1.0 + nrm((C,))
            p[f"{prefix}_bn2_beta"] = nrm((C,))
            p[f"{prefix}_bn2_mean"] = nrm((C,))
            p[f"{prefix}_bn2_var"] = pos((C,))
        return p

    key = jax.random.PRNGKey(0)
    k_p, k_x, k_r, k_p2, k_x2, k_r2 = jax.random.split(key, 6)

    # Case 1: channels=32, aff_block_r=4 -> inter=8, 16x16 spatial, f32.
    B, C, Hs, Ws = 2, 32, 16, 16
    Ci = C // 4
    params = make_params(k_p, C, Ci)
    x = jax.random.normal(k_x, (B, C, Hs, Ws), jnp.float32)
    r = jax.random.normal(k_r, (B, C, Hs, Ws), jnp.float32)

    out = jax.block_until_ready(clap_audio_aff_block(x, r, params, bn_eps=bn_eps))
    ref = _reference(x, r, params, bn_eps)
    assert out.shape == x.shape and out.dtype == x.dtype
    err = float(jnp.max(jnp.abs(out - ref)))
    assert err < 1e-4, f"f32 case max_err={err}"

    # Case 2: non-128-multiple spatial (padding path) + odd batch (batch tiling).
    B2, C2, H2, W2 = 3, 16, 10, 10
    Ci2 = C2 // 4
    params2 = make_params(k_p2, C2, Ci2)
    x2 = jax.random.normal(k_x2, (B2, C2, H2, W2), jnp.float32)
    r2 = jax.random.normal(k_r2, (B2, C2, H2, W2), jnp.float32)
    out2 = jax.block_until_ready(clap_audio_aff_block(x2, r2, params2, bn_eps=bn_eps))
    ref2 = _reference(x2, r2, params2, bn_eps)
    err2 = float(jnp.max(jnp.abs(out2 - ref2)))
    assert err2 < 1e-4, f"padded case max_err={err2}"

    # Case 3: bf16 end-to-end (native-dtype path; HBM traffic halved).
    xb = x.astype(jnp.bfloat16)
    rb = r.astype(jnp.bfloat16)
    outb = jax.block_until_ready(clap_audio_aff_block(xb, rb, params, bn_eps=bn_eps))
    assert outb.dtype == jnp.bfloat16 and outb.shape == x.shape
    refb = _reference(xb.astype(jnp.float32), rb.astype(jnp.float32), params, bn_eps)
    errb = float(jnp.max(jnp.abs(outb.astype(jnp.float32) - refb)))
    assert errb < 0.25, f"bf16 case max_err={errb}"

    print("KERNEL_OK")
</pallas_src>

<mosaic_0001>
module attributes {stable_mosaic.version = 11 : i64} {
  func.func @_pool_global_kernel(%arg0: i32, %arg1: i32, %arg2: memref<2x32x256xf32, #tpu.memory_space<vmem>>, %arg3: memref<2x32x256xf32, #tpu.memory_space<vmem>>, %arg4: memref<8x32xf32, #tpu.memory_space<vmem>>, %arg5: memref<8x1xf32, #tpu.memory_space<vmem>>, %arg6: memref<32x8xf32, #tpu.memory_space<vmem>>, %arg7: memref<32x1xf32, #tpu.memory_space<vmem>>, %arg8: memref<2x32x128xf32, #tpu.memory_space<vmem>>, %arg9: memref<2x32x1xf32, #tpu.memory_space<vmem>>) attributes {dimension_semantics = [#tpu.dimension_semantics<parallel>, #tpu.dimension_semantics<arbitrary>], iteration_bounds = array<i64: 1, 1>, scalar_prefetch = 0 : i64, scratch_operands = 1 : i64, tpu.core_type = #tpu.core_type<tc>, window_params = [{transform_indices = @transform_0, window_bounds = array<i64: 2, 32, 256>}, {transform_indices = @transform_1, window_bounds = array<i64: 2, 32, 256>}, {pipeline_mode = #tpu.pipeline_mode<synchronous>, transform_indices = @transform_2, window_bounds = array<i64: 8, 32>}, {pipeline_mode = #tpu.pipeline_mode<synchronous>, transform_indices = @transform_3, window_bounds = array<i64: 8, 1>}, {pipeline_mode = #tpu.pipeline_mode<synchronous>, transform_indices = @transform_4, window_bounds = array<i64: 32, 8>}, {pipeline_mode = #tpu.pipeline_mode<synchronous>, transform_indices = @transform_5, window_bounds = array<i64: 32, 1>}, {transform_indices = @transform_6, window_bounds = array<i64: 2, 32, 128>}]} {
    %c0_i32 = arith.constant 0 : i32
    %0 = arith.cmpi eq, %arg1, %c0_i32 : i32
    %1 = arith.extui %0 : i1 to i32
    %c0_i32_0 = arith.constant 0 : i32
    %2 = arith.cmpi ne, %1, %c0_i32_0 : i32
    scf.if %2 {
      %cst_14 = arith.constant 0.000000e+00 : f32
      %14 = vector.broadcast %cst_14 : f32 to vector<2x32x1xf32>
      %c0_15 = arith.constant 0 : index
      %c0_16 = arith.constant 0 : index
      %c0_17 = arith.constant 0 : index
      %15 = vector.load %arg9[%c0_15, %c0_16, %c0_17] : memref<2x32x1xf32, #tpu.memory_space<vmem>>, vector<2x32x1xf32>
      tpu.vector_store %arg9[%c0_15, %c0_16, %c0_17], %14 {strides = array<i32>} : memref<2x32x1xf32, #tpu.memory_space<vmem>>, vector<2x32x1xf32>,
    } else {
    }
    %c0 = arith.constant 0 : index
    %c0_1 = arith.constant 0 : index
    %c0_2 = arith.constant 0 : index
    %3 = vector.load %arg2[%c0, %c0_1, %c0_2] : memref<2x32x256xf32, #tpu.memory_space<vmem>>, vector<2x32x256xf32>
    %c0_3 = arith.constant 0 : index
    %c0_4 = arith.constant 0 : index
    %c0_5 = arith.constant 0 : index
    %4 = vector.load %arg3[%c0_3, %c0_4, %c0_5] : memref<2x32x256xf32, #tpu.memory_space<vmem>>, vector<2x32x256xf32>
    %5 = arith.addf %3, %4 : vector<2x32x256xf32>
    %c0_6 = arith.constant 0 : index
    %c0_7 = arith.constant 0 : index
    %c0_8 = arith.constant 0 : index
    %6 = vector.load %arg9[%c0_6, %c0_7, %c0_8] : memref<2x32x1xf32, #tpu.memory_space<vmem>>, vector<2x32x1xf32>
    %cst = arith.constant dense<0.000000e+00> : vector<2x32xf32>
    %7 = vector.multi_reduction <add>, %5, %cst [2] : vector<2x32x256xf32> to vector<2x32xf32>
    %8 = vector.shape_cast %7 : vector<2x32xf32> to vector<2x32x1xf32>
    %9 = arith.addf %6, %8 : vector<2x32x1xf32>
    %c0_9 = arith.constant 0 : index
    %c0_10 = arith.constant 0 : index
    %c0_11 = arith.constant 0 : index
    %10 = vector.load %arg9[%c0_9, %c0_10, %c0_11] : memref<2x32x1xf32, #tpu.memory_space<vmem>>, vector<2x32x1xf32>
    tpu.vector_store %arg9[%c0_9, %c0_10, %c0_11], %9 {strides = array<i32>} : memref<2x32x1xf32, #tpu.memory_space<vmem>>, vector<2x32x1xf32>,
    %c0_i32_12 = arith.constant 0 : i32
    %11 = arith.cmpi eq, %arg1, %c0_i32_12 : i32
    %12 = arith.extui %11 : i1 to i32
    %c0_i32_13 = arith.constant 0 : i32
    %13 = arith.cmpi ne, %12, %c0_i32_13 : i32
    scf.if %13 {
      %c0_14 = arith.constant 0 : index
      %c0_15 = arith.constant 0 : index
      %14 = vector.load %arg4[%c0_14, %c0_15] : memref<8x32xf32, #tpu.memory_space<vmem>>, vector<8x32xf32>
      %c0_16 = arith.constant 0 : index
      %c0_17 = arith.constant 0 : index
      %15 = vector.load %arg5[%c0_16, %c0_17] : memref<8x1xf32, #tpu.memory_space<vmem>>, vector<8x1xf32>
      %c0_18 = arith.constant 0 : index
      %c0_19 = arith.constant 0 : index
      %16 = vector.load %arg6[%c0_18, %c0_19] : memref<32x8xf32, #tpu.memory_space<vmem>>, vector<32x8xf32>
      %c0_20 = arith.constant 0 : index
      %c0_21 = arith.constant 0 : index
      %17 = vector.load %arg7[%c0_20, %c0_21] : memref<32x1xf32, #tpu.memory_space<vmem>>, vector<32x1xf32>
      %c0_22 = arith.constant 0 : index
      %c0_23 = arith.constant 0 : index
      %c0_24 = arith.constant 0 : index
      %18 = vector.load %arg9[%c0_22, %c0_23, %c0_24] : memref<2x32x1xf32, #tpu.memory_space<vmem>>, vector<1x32x1xf32>
      %19 = vector.shape_cast %18 : vector<1x32x1xf32> to vector<32x1xf32>
      %cst_25 = arith.constant 3.906250e-03 : f32
      %20 = vector.broadcast %cst_25 : f32 to vector<32x1xf32>
      %21 = arith.mulf %19, %20 : vector<32x1xf32>
      %22 = vector.shape_cast %21 : vector<32x1xf32> to vector<32x1xf32>
      %23 = vector.broadcast %22 : vector<32x1xf32> to vector<32x128xf32>
      %cst_26 = arith.constant dense<0.000000e+00> : vector<8x128xf32>
      %24 = tpu.matmul %14, %23, %cst_26 {dimension_numbers = #tpu.dot_dimension_numbers<[1], [0], [0], [1], [0, 0, 1, 1], [], []>} : vector<8x32xf32>, vector<32x128xf32>, vector<8x128xf32> -> vector<8x128xf32>
      %25 = vector.broadcast %15 : vector<8x1xf32> to vector<8x128xf32>
      %26 = arith.addf %24, %25 : vector<8x128xf32>
      %cst_27 = arith.constant 0.000000e+00 : f32
      %27 = vector.broadcast %cst_27 : f32 to vector<8x128xf32>
      %28 = arith.maximumf %26, %27 : vector<8x128xf32>
      %cst_28 = arith.constant dense<0.000000e+00> : vector<32x128xf32>
      %29 = tpu.matmul %16, %28, %cst_28 {dimension_numbers = #tpu.dot_dimension_numbers<[1], [0], [0], [1], [0, 0, 1, 1], [], []>} : vector<32x8xf32>, vector<8x128xf32>, vector<32x128xf32> -> vector<32x128xf32>
      %30 = vector.broadcast %17 : vector<32x1xf32> to vector<32x128xf32>
      %31 = arith.addf %29, %30 : vector<32x128xf32>
      %c0_29 = arith.constant 0 : index
      %c0_30 = arith.constant 0 : index
      %c0_31 = arith.constant 0 : index
      %32 = vector.load %arg8[%c0_29, %c0_30, %c0_31] : memref<2x32x128xf32, #tpu.memory_space<vmem>>, vector<1x32x128xf32>
      %33 = vector.shape_cast %32 : vector<1x32x128xf32> to vector<32x128xf32>
      %34 = vector.shape_cast %31 : vector<32x128xf32> to vector<1x32x128xf32>
      tpu.vector_store %arg8[%c0_29, %c0_30, %c0_31], %34 {strides = array<i32>} : memref<2x32x128xf32, #tpu.memory_space<vmem>>, vector<1x32x128xf32>,
      %c1 = arith.constant 1 : index
      %c0_32 = arith.constant 0 : index
      %c0_33 = arith.constant 0 : index
      %35 = vector.load %arg9[%c1, %c0_32, %c0_33] : memref<2x32x1xf32, #tpu.memory_space<vmem>>, vector<1x32x1xf32>
      %36 = vector.shape_cast %35 : vector<1x32x1xf32> to vector<32x1xf32>
      %cst_34 = arith.constant 3.906250e-03 : f32
      %37 = vector.broadcast %cst_34 : f32 to vector<32x1xf32>
      %38 = arith.mulf %36, %37 : vector<32x1xf32>
      %39 = vector.shape_cast %38 : vector<32x1xf32> to vector<32x1xf32>
      %40 = vector.broadcast %39 : vector<32x1xf32> to vector<32x128xf32>
      %cst_35 = arith.constant dense<0.000000e+00> : vector<8x128xf32>
      %41 = tpu.matmul %14, %40, %cst_35 {dimension_numbers = #tpu.dot_dimension_numbers<[1], [0], [0], [1], [0, 0, 1, 1], [], []>} : vector<8x32xf32>, vector<32x128xf32>, vector<8x128xf32> -> vector<8x128xf32>
      %42 = vector.broadcast %15 : vector<8x1xf32> to vector<8x128xf32>
      %43 = arith.addf %41, %42 : vector<8x128xf32>
      %cst_36 = arith.constant 0.000000e+00 : f32
      %44 = vector.broadcast %cst_36 : f32 to vector<8x128xf32>
      %45 = arith.maximumf %43, %44 : vector<8x128xf32>
      %cst_37 = arith.constant dense<0.000000e+00> : vector<32x128xf32>
      %46 = tpu.matmul %16, %45, %cst_37 {dimension_numbers = #tpu.dot_dimension_numbers<[1], [0], [0], [1], [0, 0, 1, 1], [], []>} : vector<32x8xf32>, vector<8x128xf32>, vector<32x128xf32> -> vector<32x128xf32>
      %47 = vector.broadcast %17 : vector<32x1xf32> to vector<32x128xf32>
      %48 = arith.addf %46, %47 : vector<32x128xf32>
      %c1_38 = arith.constant 1 : index
      %c0_39 = arith.constant 0 : index
      %c0_40 = arith.constant 0 : index
      %49 = vector.load %arg8[%c1_38, %c0_39, %c0_40] : memref<2x32x128xf32, #tpu.memory_space<vmem>>, vector<1x32x128xf32>
      %50 = vector.shape_cast %49 : vector<1x32x128xf32> to vector<32x128xf32>
      %51 = vector.shape_cast %48 : vector<32x128xf32> to vector<1x32x128xf32>
      tpu.vector_store %arg8[%c1_38, %c0_39, %c0_40], %51 {strides = array<i32>} : memref<2x32x128xf32, #tpu.memory_space<vmem>>, vector<1x32x128xf32>,
    } else {
    }
    return
  }
  func.func @transform_0(%arg0: i32, %arg1: i32) -> (i32, i32, i32) {
    %c0_i32 = arith.constant 0 : i32
    %c0_i32_0 = arith.constant 0 : i32
    return %arg0, %c0_i32, %arg1 : i32, i32, i32
  }
  func.func @transform_1(%arg0: i32, %arg1: i32) -> (i32, i32, i32) {
    %c0_i32 = arith.constant 0 : i32
    %c0_i32_0 = arith.constant 0 : i32
    return %arg0, %c0_i32, %arg1 : i32, i32, i32
  }
  func.func @transform_2(%arg0: i32, %arg1: i32) -> (i32, i32) {
    %c0_i32 = arith.constant 0 : i32
    %c0_i32_0 = arith.constant 0 : i32
    %c0_i32_1 = arith.constant 0 : i32
    return %c0_i32, %c0_i32_0 : i32, i32
  }
  func.func @transform_3(%arg0: i32, %arg1: i32) -> (i32, i32) {
    %c0_i32 = arith.constant 0 : i32
    %c0_i32_0 = arith.constant 0 : i32
    %c0_i32_1 = arith.constant 0 : i32
    return %c0_i32, %c0_i32_0 : i32, i32
  }
  func.func @transform_4(%arg0: i32, %arg1: i32) -> (i32, i32) {
    %c0_i32 = arith.constant 0 : i32
    %c0_i32_0 = arith.constant 0 : i32
    %c0_i32_1 = arith.constant 0 : i32
    return %c0_i32, %c0_i32_0 : i32, i32
  }
  func.func @transform_5(%arg0: i32, %arg1: i32) -> (i32, i32) {
    %c0_i32 = arith.constant 0 : i32
    %c0_i32_0 = arith.constant 0 : i32
    %c0_i32_1 = arith.constant 0 : i32
    return %c0_i32, %c0_i32_0 : i32, i32
  }
  func.func @transform_6(%arg0: i32, %arg1: i32) -> (i32, i32, i32) {
    %c0_i32 = arith.constant 0 : i32
    %c0_i32_0 = arith.constant 0 : i32
    %c0_i32_1 = arith.constant 0 : i32
    return %arg0, %c0_i32, %c0_i32_0 : i32, i32, i32
  }
}

</mosaic_0001>

<llo_original>
// kernel: tpu_custom_call.1
$region0: #{tpu_custom_call.1}
  #allocation0 [shape = 'u32[]', space=smem, size = 0x4, offset = 0x4, fixed_abs, tag = 'smem constant byte address 0x4 - core index']
  #allocation1 [shape = 'u32[144,128]{1,0:T(1,128)}', space=vmem, size = 0x12000, scoped, tag = 'internal scratch']
  #allocation2 [shape = 'f32[2,32,1]{2,1,0:T(8,128)}', space=vmem, size = 0x8000, scoped, tag = 'scratch operand']
  %s0 = inlined_call_operand.hbm [shape: f32[2,32,256], index: 0, kind: input, shape index: {}]
  %s1 = inlined_call_operand.hbm [shape: f32[2,32,256], index: 1, kind: input, shape index: {}]
  %s2 = inlined_call_operand.vmem [shape: f32[8,32], index: 2, kind: input, shape index: {}]
  %s3 = inlined_call_operand.vmem [shape: f32[8,1], index: 3, kind: input, shape index: {}]
  %s4 = inlined_call_operand.vmem [shape: f32[32,8], index: 4, kind: input, shape index: {}]
  %s5 = inlined_call_operand.vmem [shape: f32[32,1], index: 5, kind: input, shape index: {}]
  %s6 = inlined_call_operand.hbm [shape: f32[2,32,128], index: 6, kind: output, shape index: {}]
  %s7 = sld [smem:[#allocation0]]
  $region50: #{tpu_custom_call.1} parent=0
    _
  %s9 = ssub.s32 1, %s7
  %s10 = scalar_select 0, %s9, %s7
  $region1: #{tpu_custom_call.1} parent=0
    #allocation3 [shape = 'u8[65536]{0}', space=vmem, size = 0x10000, scoped, tag = 'input window, operand 0, single buffered']
    #allocation4 [shape = 's32[1]{0}', space=sflag, size = 0x4, scoped, tag = 'scoped memory for tpu_custom_call.1']
    #allocation5 [shape = 's32[1]{0}', space=sflag, size = 0x4, scoped, tag = 'scoped memory for tpu_custom_call.1']
    #allocation6 [shape = 'u8[65536]{0}', space=vmem, size = 0x10000, scoped, tag = 'input window, operand 1, single buffered']
    #allocation7 [shape = 's32[1]{0}', space=sflag, size = 0x4, scoped, tag = 'scoped memory for tpu_custom_call.1']
    #allocation8 [shape = 'u8[32768]{0}', space=vmem, size = 0x8000, scoped, tag = 'output window, operand 0, single buffered']
    %11 = vsyncpa [#allocation4], 0
    %12 = vsyncpa [#allocation7], 0
    %13 = vsyncpa [#allocation5], 0
    // Predicated region
    $region2: #{tpu_custom_call.1} parent=1 // pred_check
      _
    $region3: #{tpu_custom_call.1} parent=1 // pred_check_branch
      %15 = sbr.rel (0) target = $region5
    $region4: #{tpu_custom_call.1} parent=1 // pred_region
      %s17 = ssub.s32 2048, 2048
      %18 = vsyncadd [#allocation4], %s17
      %s19 = sshll.u32 [#allocation3], 4
      %s20 = int_to_ptr.vmem [resolvable:$true] %s19
      %25 = dma.hbm_to_vmem [thread:$0]  %s0, 2048, %s20, [#allocation4], 256, 256, 16
    $region5: #{tpu_custom_call.1} parent=1 // pred_fallthru
      _
    // Predicated region
    $region6: #{tpu_custom_call.1} parent=1 // pred_check
      _
    $region7: #{tpu_custom_call.1} parent=1 // pred_check_branch
      %27 = sbr.rel (0) target = $region9
    $region8: #{tpu_custom_call.1} parent=1 // pred_region
      %s29 = ssub.s32 2048, 2048
      %30 = vsyncadd [#allocation7], %s29
      %s31 = sshll.u32 [#allocation6], 4
      %s32 = int_to_ptr.vmem [resolvable:$true] %s31
      %37 = dma.hbm_to_vmem [thread:$0]  %s1, 2048, %s32, [#allocation7], 256, 256, 16
    $region9: #{tpu_custom_call.1} parent=1 // pred_fallthru
      _
    // Predicated region
    $region10: #{tpu_custom_call.1} parent=1 // pred_check
      _
    $region11: #{tpu_custom_call.1} parent=1 // pred_check_branch
      %39 = sbr.rel (0) target = $region13
    $region12: #{tpu_custom_call.1} parent=1 // pred_region
      _
    $region13: #{tpu_custom_call.1} parent=1 // pred_fallthru
      _
    // Predicated region
    $region14: #{tpu_custom_call.1} parent=1 // pred_check
      _
    $region15: #{tpu_custom_call.1} parent=1 // pred_check_branch
      %41 = sbr.rel (0) target = $region17
    $region16: #{tpu_custom_call.1} parent=1 // pred_region
      _
    $region17: #{tpu_custom_call.1} parent=1 // pred_fallthru
      _
    // Predicated region
    $region18: #{tpu_custom_call.1} parent=1 // pred_check
      _
    $region19: #{tpu_custom_call.1} parent=1 // pred_check_branch
      %43 = sbr.rel (0) target = $region21
    $region20: #{tpu_custom_call.1} parent=1 // pred_region
      _
    $region21: #{tpu_custom_call.1} parent=1 // pred_fallthru
      _
    // Predicated region
    $region22: #{tpu_custom_call.1} parent=1 // pred_check
      _
    $region23: #{tpu_custom_call.1} parent=1 // pred_check_branch
      %45 = sbr.rel (0) target = $region25
    $region24: #{tpu_custom_call.1} parent=1 // pred_region
      _
    $region25: #{tpu_custom_call.1} parent=1 // pred_fallthru
      _
    // Predicated region
    $region26: #{tpu_custom_call.1} parent=1 // pred_check
      _
    $region27: #{tpu_custom_call.1} parent=1 // pred_check_branch
      %47 = sbr.rel (0) target = $region29
    $region28: #{tpu_custom_call.1} parent=1 // pred_region
      %48 = dma.done [#allocation4], 2048
    $region29: #{tpu_custom_call.1} parent=1 // pred_fallthru
      _
    // Predicated region
    $region30: #{tpu_custom_call.1} parent=1 // pred_check
      _
    $region31: #{tpu_custom_call.1} parent=1 // pred_check_branch
      %50 = sbr.rel (0) target = $region33
    $region32: #{tpu_custom_call.1} parent=1 // pred_region
      %51 = dma.done [#allocation7], 2048
    $region33: #{tpu_custom_call.1} parent=1 // pred_fallthru
      _
    %p52 = scmp.eq.s32.totalorder 0, 0
    // Predicated region
    $region34: #{tpu_custom_call.1} parent=1 // pred_check
      %p53 = pneg %p52
    $region35: #{tpu_custom_call.1} parent=1 // pred_check_branch
      %55 = sbr.rel (%p53) target = $region37
    $region36: #{tpu_custom_call.1} parent=1 // pred_region
      %vm56 = vcmask 7168
      %57 = vst.msk [vmem:[#allocation2] sm:$0xff] %vm56, 0.0
      %58 = vst.msk [vmem:[#allocation2 + $0x8] sm:$0xff] %vm56, 0.0
      %59 = vst.msk [vmem:[#allocation2 + $0x10] sm:$0xff] %vm56, 0.0
      %60 = vst.msk [vmem:[#allocation2 + $0x18] sm:$0xff] %vm56, 0.0
      %61 = vst.msk [vmem:[#allocation2 + $0x20] sm:$0xff] %vm56, 0.0
      %62 = vst.msk [vmem:[#allocation2 + $0x28] sm:$0xff] %vm56, 0.0
      %63 = vst.msk [vmem:[#allocation2 + $0x30] sm:$0xff] %vm56, 0.0
      %64 = vst.msk [vmem:[#allocation2 + $0x38] sm:$0xff] %vm56, 0.0
    $region37: #{tpu_custom_call.1} parent=1 // pred_fallthru
      _
    %v65 = vld [vmem:[#allocation3] sm:$0xff]
    %v66 = vld [vmem:[#allocation3 + $0x8] sm:$0xff]
    %v67 = vld [vmem:[#allocation3 + $0x10] sm:$0xff]
    %v68 = vld [vmem:[#allocation3 + $0x18] sm:$0xff]
    %v69 = vld [vmem:[#allocation3 + $0x20] sm:$0xff]
    %v70 = vld [vmem:[#allocation3 + $0x28] sm:$0xff]
    %v71 = vld [vmem:[#allocation3 + $0x30] sm:$0xff]
    %v72 = vld [vmem:[#allocation3 + $0x38] sm:$0xff]
    %v73 = vld [vmem:[#allocation3 + $0x40] sm:$0xff]
    %v74 = vld [vmem:[#allocation3 + $0x48] sm:$0xff]
    %v75 = vld [vmem:[#allocation3 + $0x50] sm:$0xff]
    %v76 = vld [vmem:[#allocation3 + $0x58] sm:$0xff]
    %v77 = vld [vmem:[#allocation3 + $0x60] sm:$0xff]
    %v78 = vld [vmem:[#allocation3 + $0x68] sm:$0xff]
    %v79 = vld [vmem:[#allocation3 + $0x70] sm:$0xff]
    %v80 = vld [vmem:[#allocation3 + $0x78] sm:$0xff]
    %v81 = vld [vmem:[#allocation6] sm:$0xff]
    %v82 = vld [vmem:[#allocation6 + $0x8] sm:$0xff]
    %v83 = vld [vmem:[#allocation6 + $0x10] sm:$0xff]
    %v84 = vld [vmem:[#allocation6 + $0x18] sm:$0xff]
    %v85 = vld [vmem:[#allocation6 + $0x20] sm:$0xff]
    %v86 = vld [vmem:[#allocation6 + $0x28] sm:$0xff]
    %v87 = vld [vmem:[#allocation6 + $0x30] sm:$0xff]
    %v88 = vld [vmem:[#allocation6 + $0x38] sm:$0xff]
    %v89 = vld [vmem:[#allocation6 + $0x40] sm:$0xff]
    %v90 = vld [vmem:[#allocation6 + $0x48] sm:$0xff]
    %v91 = vld [vmem:[#allocation6 + $0x50] sm:$0xff]
    %v92 = vld [vmem:[#allocation6 + $0x58] sm:$0xff]
    %v93 = vld [vmem:[#allocation6 + $0x60] sm:$0xff]
    %v94 = vld [vmem:[#allocation6 + $0x68] sm:$0xff]
    %v95 = vld [vmem:[#allocation6 + $0x70] sm:$0xff]
    %v96 = vld [vmem:[#allocation6 + $0x78] sm:$0xff]
    %v97 = vadd.f32 %v65, %v81
    %v98 = vadd.f32 %v66, %v82
    %v99 = vadd.f32 %v67, %v83
    %v100 = vadd.f32 %v68, %v84
    %v101 = vadd.f32 %v69, %v85
    %v102 = vadd.f32 %v70, %v86
    %v103 = vadd.f32 %v71, %v87
    %v104 = vadd.f32 %v72, %v88
    %v105 = vadd.f32 %v73, %v89
    %v106 = vadd.f32 %v74, %v90
    %v107 = vadd.f32 %v75, %v91
    %v108 = vadd.f32 %v76, %v92
    %v109 = vadd.f32 %v77, %v93
    %v110 = vadd.f32 %v78, %v94
    %v111 = vadd.f32 %v79, %v95
    %v112 = vadd.f32 %v80, %v96
    %v113 = vld [vmem:[#allocation2] sm:$0xff]
    %v114 = vld [vmem:[#allocation2 + $0x8] sm:$0xff]
    %v115 = vld [vmem:[#allocation2 + $0x10] sm:$0xff]
    %v116 = vld [vmem:[#allocation2 + $0x18] sm:$0xff]
    %v117 = vld [vmem:[#allocation2 + $0x20] sm:$0xff]
    %v118 = vld [vmem:[#allocation2 + $0x28] sm:$0xff]
    %v119 = vld [vmem:[#allocation2 + $0x30] sm:$0xff]
    %v120 = vld [vmem:[#allocation2 + $0x38] sm:$0xff]
    %v121 = vadd.f32 %v97, %v98
    %122 = vadd.xlane.f32.xlu0 %v121
    %v123 = vpop.xlane.xlu0 %122
    %v124 = vadd.f32 %v99, %v100
    %125 = vadd.xlane.f32.xlu0 %v124
    %v126 = vpop.xlane.xlu0 %125
    %v127 = vadd.f32 %v101, %v102
    %128 = vadd.xlane.f32.xlu0 %v127
    %v129 = vpop.xlane.xlu0 %128
    %v130 = vadd.f32 %v103, %v104
    %131 = vadd.xlane.f32.xlu0 %v130
    %v132 = vpop.xlane.xlu0 %131
    %v133 = vadd.f32 %v105, %v106
    %134 = vadd.xlane.f32.xlu0 %v133
    %v135 = vpop.xlane.xlu0 %134
    %v136 = vadd.f32 %v107, %v108
    %137 = vadd.xlane.f32.xlu0 %v136
    %v138 = vpop.xlane.xlu0 %137
    %v139 = vadd.f32 %v109, %v110
    %140 = vadd.xlane.f32.xlu0 %v139
    %v141 = vpop.xlane.xlu0 %140
    %v142 = vadd.f32 %v111, %v112
    %143 = vadd.xlane.f32.xlu0 %v142
    %v144 = vpop.xlane.xlu0 %143
    %v145 = vadd.f32 %v113, %v123
    %v146 = vadd.f32 %v114, %v126
    %v147 = vadd.f32 %v115, %v129
    %v148 = vadd.f32 %v116, %v132
    %v149 = vadd.f32 %v117, %v135
    %v150 = vadd.f32 %v118, %v138
    %v151 = vadd.f32 %v119, %v141
    %v152 = vadd.f32 %v120, %v144
    %vm153 = vcmask 7168
    %154 = vst.msk [vmem:[#allocation2] sm:$0xff] %vm153, %v145
    %155 = vst.msk [vmem:[#allocation2 + $0x8] sm:$0xff] %vm153, %v146
    %156 = vst.msk [vmem:[#allocation2 + $0x10] sm:$0xff] %vm153, %v147
    %157 = vst.msk [vmem:[#allocation2 + $0x18] sm:$0xff] %vm153, %v148
    %158 = vst.msk [vmem:[#allocation2 + $0x20] sm:$0xff] %vm153, %v149
    %159 = vst.msk [vmem:[#allocation2 + $0x28] sm:$0xff] %vm153, %v150
    %160 = vst.msk [vmem:[#allocation2 + $0x30] sm:$0xff] %vm153, %v151
    %161 = vst.msk [vmem:[#allocation2 + $0x38] sm:$0xff] %vm153, %v152
    // Predicated region
    $region38: #{tpu_custom_call.1} parent=1 // pred_check
      %p162 = pneg %p52
    $region39: #{tpu_custom_call.1} parent=1 // pred_check_branch
      %164 = sbr.rel (%p162) target = $region41
    $region40: #{tpu_custom_call.1} parent=1 // pred_region
      %v165 = vld [vmem:[%s2] sm:$0xff]
      %v166 = vld [vmem:[%s3] sm:$0xff]
      %v167 = vld [vmem:[%s4] sm:$0xff]
      %v168 = vld [vmem:[%s4 + $0x8] sm:$0xff]
      %v169 = vld [vmem:[%s4 + $0x10] sm:$0xff]
      %v170 = vld [vmem:[%s4 + $0x18] sm:$0xff]
      %v171 = vld [vmem:[%s5] sm:$0xff]
      %v172 = vld [vmem:[%s5 + $0x8] sm:$0xff]
      %v173 = vld [vmem:[%s5 + $0x10] sm:$0xff]
      %v174 = vld [vmem:[%s5 + $0x18] sm:$0xff]
      %v175 = vld [vmem:[#allocation2] sm:$0xff]
      %v176 = vld [vmem:[#allocation2 + $0x8] sm:$0xff]
      %v177 = vld [vmem:[#allocation2 + $0x10] sm:$0xff]
      %v178 = vld [vmem:[#allocation2 + $0x18] sm:$0xff]
      %v179 = vmul.f32 %v175, 0.00390625
      %v180 = vmul.f32 %v176, 0.00390625
      %v181 = vmul.f32 %v177, 0.00390625
      %v182 = vmul.f32 %v178, 0.00390625
      %184 = vset.pattern.permute.xlu0 0
      %185 = vperm.xlu0 %184, %v179
      %v186 = vpop.permute.xlu0 %185
      %189 = vset.pattern.permute.xlu0 0
      %190 = vperm.xlu0 %189, %v180
      %v191 = vpop.permute.xlu0 %190
      %194 = vset.pattern.permute.xlu0 0
      %195 = vperm.xlu0 %194, %v181
      %v196 = vpop.permute.xlu0 %195
      %199 = vset.pattern.permute.xlu0 0
      %200 = vperm.xlu0 %199, %v182
      %v201 = vpop.permute.xlu0 %200
      %204 = vset.pattern.permute.xlu0 0
      %205 = vperm.xlu0 %204, %v166
      %v206 = vpop.permute.xlu0 %205
      %vm208 = vcmask 261120
      %v210 = vsel %vm208, %v165, 0
      %212 = vmatprep.subr.mxu0 0.0
      %213 = vmatpush1.msra.mxu0 %v186
      %214 = vmatprep.subr.mxu0 0.0
      %215 = vmatpush1.msra.mxu0 %v191
      %216 = vmatprep.subr.mxu0 0.0
      %217 = vmatpush1.msra.mxu0 %v196
      %218 = vmatprep.subr.mxu0 0.0
      %219 = vmatpush1.msra.mxu0 %v201
      %220 = vmatprep.subr.mxu0 0.0
      %221 = vmatpush1.msra.mxu0 0.0
      %222 = vmatprep.subr.mxu0 0.0
      %223 = vmatpush1.msra.mxu0 0.0
      %224 = vmatprep.subr.mxu0 0.0
      %225 = vmatpush1.msra.mxu0 0.0
      %226 = vmatprep.subr.mxu0 0.0
      %227 = vmatpush1.msra.mxu0 0.0
      %228 = vmatprep.subr.mxu0 0.0
      %229 = vmatpush1.msra.mxu0 0.0
      %230 = vmatprep.subr.mxu0 0.0
      %231 = vmatpush1.msra.mxu0 0.0
      %232 = vmatprep.subr.mxu0 0.0
      %233 = vmatpush1.msra.mxu0 0.0
      %234 = vmatprep.subr.mxu0 0.0
      %235 = vmatpush1.msra.mxu0 0.0
      %236 = vmatprep.subr.mxu0 0.0
      %237 = vmatpush1.msra.mxu0 0.0
      %238 = vmatprep.subr.mxu0 0.0
      %239 = vmatpush1.msra.mxu0 0.0
      %240 = vmatprep.subr.mxu0 0.0
      %241 = vmatpush1.msra.mxu0 0.0
      %242 = vmatprep.subr.mxu0 0.0
      %243 = vmatpush1.msra.mxu0 0.0
      %244 = vmatprep.subr.mxu0 0.0
      %245 = vmatpush1.msra.mxu0 0.0
      %246 = vmatprep.subr.mxu0 0.0
      %247 = vmatpush1.msra.mxu0 0.0
      %248 = vmatprep.subr.mxu0 0.0
      %249 = vmatpush1.msra.mxu0 0.0
      %250 = vmatprep.subr.mxu0 0.0
      %251 = vmatpush1.msra.mxu0 0.0
      %252 = vmatprep.subr.mxu0 0.0
      %253 = vmatpush1.msra.mxu0 0.0
      %254 = vmatprep.subr.mxu0 0.0
      %255 = vmatpush1.msra.mxu0 0.0
      %256 = vmatprep.subr.mxu0 0.0
      %257 = vmatpush1.msra.mxu0 0.0
      %258 = vmatprep.subr.mxu0 0.0
      %259 = vmatpush1.msra.mxu0 0.0
      %260 = vmatprep.subr.mxu0 0.0
      %261 = vmatpush1.msra.mxu0 0.0
      %262 = vmatprep.subr.mxu0 0.0
      %263 = vmatpush1.msra.mxu0 0.0
      %264 = vmatprep.subr.mxu0 0.0
      %265 = vmatpush1.msra.mxu0 0.0
      %266 = vmatprep.subr.mxu0 0.0
      %267 = vmatpush1.msra.mxu0 0.0
      %268 = vmatprep.subr.mxu0 0.0
      %269 = vmatpush1.msra.mxu0 0.0
      %270 = vmatprep.subr.mxu0 0.0
      %271 = vmatpush1.msra.mxu0 0.0
      %272 = vmatprep.subr.mxu0 0.0
      %273 = vmatpush1.msra.mxu0 0.0
      %274 = vmatprep.subr.mxu0 0.0
      %275 = vmatpush1.msra.mxu0 0.0
      %276 = vmatprep.mubr.f32.mxu0 0.0
      %277 = vmatmul.mubr.f32.gmra.mrb[0].mxu0 %v210
      %v278 = vpop.f32.mrb[0].mxu0
      %v279 = vadd.f32 %v206, %v278
      %v280 = vpop.f32.mrb[0].mxu0
      %281 = vdwg.mxu0
      %v282 = vmax.f32 %v279, 0.0
      %284 = vset.pattern.permute.xlu0 0
      %285 = vperm.xlu0 %284, %v171
      %v286 = vpop.permute.xlu0 %285
      %289 = vset.pattern.permute.xlu0 0
      %290 = vperm.xlu0 %289, %v172
      %v291 = vpop.permute.xlu0 %290
      %294 = vset.pattern.permute.xlu0 0
      %295 = vperm.xlu0 %294, %v173
      %v296 = vpop.permute.xlu0 %295
      %299 = vset.pattern.permute.xlu0 0
      %300 = vperm.xlu0 %299, %v174
      %v301 = vpop.permute.xlu0 %300
      %vm303 = vcmask 64512
      %v305 = vsel %vm303, %v167, 0
      %v308 = vsel %vm303, %v168, 0
      %v311 = vsel %vm303, %v169, 0
      %v314 = vsel %vm303, %v170, 0
      %316 = vmatprep.subr.mxu0 0.0
      %317 = vmatpush1.msra.mxu0 %v282
      %318 = vmatprep.subr.mxu0 0.0
      %319 = vmatpush1.msra.mxu0 0.0
      %320 = vmatprep.subr.mxu0 0.0
      %321 = vmatpush1.msra.mxu0 0.0
      %322 = vmatprep.subr.mxu0 0.0
      %323 = vmatpush1.msra.mxu0 0.0
      %324 = vmatprep.subr.mxu0 0.0
      %325 = vmatpush1.msra.mxu0 0.0
      %326 = vmatprep.subr.mxu0 0.0
      %327 = vmatpush1.msra.mxu0 0.0
      %328 = vmatprep.subr.mxu0 0.0
      %329 = vmatpush1.msra.mxu0 0.0
      %330 = vmatprep.subr.mxu0 0.0
      %331 = vmatpush1.msra.mxu0 0.0
      %332 = vmatprep.subr.mxu0 0.0
      %333 = vmatpush1.msra.mxu0 0.0
      %334 = vmatprep.subr.mxu0 0.0
      %335 = vmatpush1.msra.mxu0 0.0
      %336 = vmatprep.subr.mxu0 0.0
      %337 = vmatpush1.msra.mxu0 0.0
      %338 = vmatprep.subr.mxu0 0.0
      %339 = vmatpush1.msra.mxu0 0.0
      %340 = vmatprep.subr.mxu0 0.0
      %341 = vmatpush1.msra.mxu0 0.0
      %342 = vmatprep.subr.mxu0 0.0
      %343 = vmatpush1.msra.mxu0 0.0
      %344 = vmatprep.subr.mxu0 0.0
      %345 = vmatpush1.msra.mxu0 0.0
      %346 = vmatprep.subr.mxu0 0.0
      %347 = vmatpush1.msra.mxu0 0.0
      %348 = vmatprep.subr.mxu0 0.0
      %349 = vmatpush1.msra.mxu0 0.0
      %350 = vmatprep.subr.mxu0 0.0
      %351 = vmatpush1.msra.mxu0 0.0
      %352 = vmatprep.subr.mxu0 0.0
      %353 = vmatpush1.msra.mxu0 0.0
      %354 = vmatprep.subr.mxu0 0.0
      %355 = vmatpush1.msra.mxu0 0.0
      %356 = vmatprep.subr.mxu0 0.0
      %357 = vmatpush1.msra.mxu0 0.0
      %358 = vmatprep.subr.mxu0 0.0
      %359 = vmatpush1.msra.mxu0 0.0
      %360 = vmatprep.subr.mxu0 0.0
      %361 = vmatpush1.msra.mxu0 0.0
      %362 = vmatprep.subr.mxu0 0.0
      %363 = vmatpush1.msra.mxu0 0.0
      %364 = vmatprep.subr.mxu0 0.0
      %365 = vmatpush1.msra.mxu0 0.0
      %366 = vmatprep.subr.mxu0 0.0
      %367 = vmatpush1.msra.mxu0 0.0
      %368 = vmatprep.subr.mxu0 0.0
      %369 = vmatpush1.msra.mxu0 0.0
      %370 = vmatprep.subr.mxu0 0.0
      %371 = vmatpush1.msra.mxu0 0.0
      %372 = vmatprep.subr.mxu0 0.0
      %373 = vmatpush1.msra.mxu0 0.0
      %374 = vmatprep.subr.mxu0 0.0
      %375 = vmatpush1.msra.mxu0 0.0
      %376 = vmatprep.subr.mxu0 0.0
      %377 = vmatpush1.msra.mxu0 0.0
      %378 = vmatprep.subr.mxu0 0.0
      %379 = vmatpush1.msra.mxu0 0.0
      %380 = vmatprep.mubr.f32.mxu0 0.0
      %381 = vmatmul.mubr.f32.gmra.mrb[0].mxu0 %v305
      %v382 = vpop.f32.mrb[0].mxu0
      %v383 = vadd.f32 %v286, %v382
      %v384 = vpop.f32.mrb[0].mxu0
      %385 = vmatprep.mubr.f32.mxu0 0.0
      %386 = vmatmul.mubr.f32.gmra.mrb[0].mxu0 %v308
      %v387 = vpop.f32.mrb[0].mxu0
      %v388 = vadd.f32 %v291, %v387
      %v389 = vpop.f32.mrb[0].mxu0
      %390 = vmatprep.mubr.f32.mxu0 0.0
      %391 = vmatmul.mubr.f32.gmra.mrb[0].mxu0 %v311
      %v392 = vpop.f32.mrb[0].mxu0
      %v393 = vadd.f32 %v296, %v392
      %v394 = vpop.f32.mrb[0].mxu0
      %395 = vmatprep.mubr.f32.mxu0 0.0
      %396 = vmatmul.mubr.f32.gmra.mrb[0].mxu0 %v314
      %v397 = vpop.f32.mrb[0].mxu0
      %v398 = vadd.f32 %v301, %v397
      %v399 = vpop.f32.mrb[0].mxu0
      %400 = vdwg.mxu0
      %401 = vst [vmem:[#allocation8] sm:$0xff] %v383
      %402 = vst [vmem:[#allocation8 + $0x8] sm:$0xff] %v388
      %403 = vst [vmem:[#allocation8 + $0x10] sm:$0xff] %v393
      %404 = vst [vmem:[#allocation8 + $0x18] sm:$0xff] %v398
      %s405 = scalar_lea.vmem [#allocation2], 32
      %v406 = vld [vmem:[%s405] sm:$0xff]
      %v407 = vld [vmem:[%s405 + $0x8] sm:$0xff]
      %v408 = vld [vmem:[%s405 + $0x10] sm:$0xff]
      %v409 = vld [vmem:[%s405 + $0x18] sm:$0xff]
      %v410 = vmul.f32 %v406, 0.00390625
      %v411 = vmul.f32 %v407, 0.00390625
      %v412 = vmul.f32 %v408, 0.00390625
      %v413 = vmul.f32 %v409, 0.00390625
      %415 = vset.pattern.permute.xlu0 0
      %416 = vperm.xlu0 %415, %v410
      %v417 = vpop.permute.xlu0 %416
      %420 = vset.pattern.permute.xlu0 0
      %421 = vperm.xlu0 %420, %v411
      %v422 = vpop.permute.xlu0 %421
      %425 = vset.pattern.permute.xlu0 0
      %426 = vperm.xlu0 %425, %v412
      %v427 = vpop.permute.xlu0 %426
      %430 = vset.pattern.permute.xlu0 0
      %431 = vperm.xlu0 %430, %v413
      %v432 = vpop.permute.xlu0 %431
      %434 = vmatprep.subr.mxu0 0.0
      %435 = vmatpush1.msra.mxu0 %v417
      %436 = vmatprep.subr.mxu0 0.0
      %437 = vmatpush1.msra.mxu0 %v422
      %438 = vmatprep.subr.mxu0 0.0
      %439 = vmatpush1.msra.mxu0 %v427
      %440 = vmatprep.subr.mxu0 0.0
      %441 = vmatpush1.msra.mxu0 %v432
      %442 = vmatprep.subr.mxu0 0.0
      %443 = vmatpush1.msra.mxu0 0.0
      %444 = vmatprep.subr.mxu0 0.0
      %445 = vmatpush1.msra.mxu0 0.0
      %446 = vmatprep.subr.mxu0 0.0
      %447 = vmatpush1.msra.mxu0 0.0
      %448 = vmatprep.subr.mxu0 0.0
      %449 = vmatpush1.msra.mxu0 0.0
      %450 = vmatprep.subr.mxu0 0.0
      %451 = vmatpush1.msra.mxu0 0.0
      %452 = vmatprep.subr.mxu0 0.0
      %453 = vmatpush1.msra.mxu0 0.0
      %454 = vmatprep.subr.mxu0 0.0
      %455 = vmatpush1.msra.mxu0 0.0
      %456 = vmatprep.subr.mxu0 0.0
      %457 = vmatpush1.msra.mxu0 0.0
      %458 = vmatprep.subr.mxu0 0.0
      %459 = vmatpush1.msra.mxu0 0.0
      %460 = vmatprep.subr.mxu0 0.0
      %461 = vmatpush1.msra.mxu0 0.0
      %462 = vmatprep.subr.mxu0 0.0
      %463 = vmatpush1.msra.mxu0 0.0
      %464 = vmatprep.subr.mxu0 0.0
      %465 = vmatpush1.msra.mxu0 0.0
      %466 = vmatprep.subr.mxu0 0.0
      %467 = vmatpush1.msra.mxu0 0.0
      %468 = vmatprep.subr.mxu0 0.0
      %469 = vmatpush1.msra.mxu0 0.0
      %470 = vmatprep.subr.mxu0 0.0
      %471 = vmatpush1.msra.mxu0 0.0
      %472 = vmatprep.subr.mxu0 0.0
      %473 = vmatpush1.msra.mxu0 0.0
      %474 = vmatprep.subr.mxu0 0.0
      %475 = vmatpush1.msra.mxu0 0.0
      %476 = vmatprep.subr.mxu0 0.0
      %477 = vmatpush1.msra.mxu0 0.0
      %478 = vmatprep.subr.mxu0 0.0
      %479 = vmatpush1.msra.mxu0 0.0
      %480 = vmatprep.subr.mxu0 0.0
      %481 = vmatpush1.msra.mxu0 0.0
      %482 = vmatprep.subr.mxu0 0.0
      %483 = vmatpush1.msra.mxu0 0.0
      %484 = vmatprep.subr.mxu0 0.0
      %485 = vmatpush1.msra.mxu0 0.0
      %486 = vmatprep.subr.mxu0 0.0
      %487 = vmatpush1.msra.mxu0 0.0
      %488 = vmatprep.subr.mxu0 0.0
      %489 = vmatpush1.msra.mxu0 0.0
      %490 = vmatprep.subr.mxu0 0.0
      %491 = vmatpush1.msra.mxu0 0.0
      %492 = vmatprep.subr.mxu0 0.0
      %493 = vmatpush1.msra.mxu0 0.0
      %494 = vmatprep.subr.mxu0 0.0
      %495 = vmatpush1.msra.mxu0 0.0
      %496 = vmatprep.subr.mxu0 0.0
      %497 = vmatpush1.msra.mxu0 0.0
      %498 = vmatprep.mubr.f32.mxu0 0.0
      %499 = vmatmul.mubr.f32.gmra.mrb[0].mxu0 %v210
      %v500 = vpop.f32.mrb[0].mxu0
      %v501 = vadd.f32 %v206, %v500
      %v502 = vpop.f32.mrb[0].mxu0
      %503 = vdwg.mxu0
      %v504 = vmax.f32 %v501, 0.0
      %505 = vmatprep.subr.mxu0 0.0
      %506 = vmatpush1.msra.mxu0 %v504
      %507 = vmatprep.subr.mxu0 0.0
      %508 = vmatpush1.msra.mxu0 0.0
      %509 = vmatprep.subr.mxu0 0.0
      %510 = vmatpush1.msra.mxu0 0.0
      %511 = vmatprep.subr.mxu0 0.0
      %512 = vmatpush1.msra.mxu0 0.0
      %513 = vmatprep.subr.mxu0 0.0
      %514 = vmatpush1.msra.mxu0 0.0
      %515 = vmatprep.subr.mxu0 0.0
      %516 = vmatpush1.msra.mxu0 0.0
      %517 = vmatprep.subr.mxu0 0.0
      %518 = vmatpush1.msra.mxu0 0.0
      %519 = vmatprep.subr.mxu0 0.0
      %520 = vmatpush1.msra.mxu0 0.0
      %521 = vmatprep.subr.mxu0 0.0
      %522 = vmatpush1.msra.mxu0 0.0
      %523 = vmatprep.subr.mxu0 0.0
      %524 = vmatpush1.msra.mxu0 0.0
      %525 = vmatprep.subr.mxu0 0.0
      %526 = vmatpush1.msra.mxu0 0.0
      %527 = vmatprep.subr.mxu0 0.0
      %528 = vmatpush1.msra.mxu0 0.0
      %529 = vmatprep.subr.mxu0 0.0
      %530 = vmatpush1.msra.mxu0 0.0
      %531 = vmatprep.subr.mxu0 0.0
      %532 = vmatpush1.msra.mxu0 0.0
      %533 = vmatprep.subr.mxu0 0.0
      %534 = vmatpush1.msra.mxu0 0.0
      %535 = vmatprep.subr.mxu0 0.0
      %536 = vmatpush1.msra.mxu0 0.0
      %537 = vmatprep.subr.mxu0 0.0
      %538 = vmatpush1.msra.mxu0 0.0
      %539 = vmatprep.subr.mxu0 0.0
      %540 = vmatpush1.msra.mxu0 0.0
      %541 = vmatprep.subr.mxu0 0.0
      %542 = vmatpush1.msra.mxu0 0.0
      %543 = vmatprep.subr.mxu0 0.0
      %544 = vmatpush1.msra.mxu0 0.0
      %545 = vmatprep.subr.mxu0 0.0
      %546 = vmatpush1.msra.mxu0 0.0
      %547 = vmatprep.subr.mxu0 0.0
      %548 = vmatpush1.msra.mxu0 0.0
      %549 = vmatprep.subr.mxu0 0.0
      %550 = vmatpush1.msra.mxu0 0.0
      %551 = vmatprep.subr.mxu0 0.0
      %552 = vmatpush1.msra.mxu0 0.0
      %553 = vmatprep.subr.mxu0 0.0
      %554 = vmatpush1.msra.mxu0 0.0
      %555 = vmatprep.subr.mxu0 0.0
      %556 = vmatpush1.msra.mxu0 0.0
      %557 = vmatprep.subr.mxu0 0.0
      %558 = vmatpush1.msra.mxu0 0.0
      %559 = vmatprep.subr.mxu0 0.0
      %560 = vmatpush1.msra.mxu0 0.0
      %561 = vmatprep.subr.mxu0 0.0
      %562 = vmatpush1.msra.mxu0 0.0
      %563 = vmatprep.subr.mxu0 0.0
      %564 = vmatpush1.msra.mxu0 0.0
      %565 = vmatprep.subr.mxu0 0.0
      %566 = vmatpush1.msra.mxu0 0.0
      %567 = vmatprep.subr.mxu0 0.0
      %568 = vmatpush1.msra.mxu0 0.0
      %569 = vmatprep.mubr.f32.mxu0 0.0
      %570 = vmatmul.mubr.f32.gmra.mrb[0].mxu0 %v305
      %v571 = vpop.f32.mrb[0].mxu0
      %v572 = vadd.f32 %v286, %v571
      %v573 = vpop.f32.mrb[0].mxu0
      %574 = vmatprep.mubr.f32.mxu0 0.0
      %575 = vmatmul.mubr.f32.gmra.mrb[0].mxu0 %v308
      %v576 = vpop.f32.mrb[0].mxu0
      %v577 = vadd.f32 %v291, %v576
      %v578 = vpop.f32.mrb[0].mxu0
      %579 = vmatprep.mubr.f32.mxu0 0.0
      %580 = vmatmul.mubr.f32.gmra.mrb[0].mxu0 %v311
      %v581 = vpop.f32.mrb[0].mxu0
      %v582 = vadd.f32 %v296, %v581
      %v583 = vpop.f32.mrb[0].mxu0
      %584 = vmatprep.mubr.f32.mxu0 0.0
      %585 = vmatmul.mubr.f32.gmra.mrb[0].mxu0 %v314
      %v586 = vpop.f32.mrb[0].mxu0
      %v587 = vadd.f32 %v301, %v586
      %v588 = vpop.f32.mrb[0].mxu0
      %589 = vdwg.mxu0
      %s590 = scalar_lea.vmem [#allocation8], 32
      %591 = vst [vmem:[%s590] sm:$0xff] %v572
      %592 = vst [vmem:[%s590 + $0x8] sm:$0xff] %v577
      %593 = vst [vmem:[%s590 + $0x10] sm:$0xff] %v582
      %594 = vst [vmem:[%s590 + $0x18] sm:$0xff] %v587
    $region41: #{tpu_custom_call.1} parent=1 // pred_fallthru
      _
    // Predicated region
    $region42: #{tpu_custom_call.1} parent=1 // pred_check
      _
    $region43: #{tpu_custom_call.1} parent=1 // pred_check_branch
      %596 = sbr.rel (0) target = $region45
    $region44: #{tpu_custom_call.1} parent=1 // pred_region
      %s598 = ssub.s32 1024, 1024
      %599 = vsyncadd [#allocation5], %s598
      %s600 = sshll.u32 [#allocation8], 4
      %s601 = int_to_ptr.vmem [resolvable:$true] %s600
      %606 = dma.vmem_to_hbm [thread:$0]  %s601, 1024, %s6, [#allocation5], 128, 128, 8
    $region45: #{tpu_custom_call.1} parent=1 // pred_fallthru
      _
    // Predicated region
    $region46: #{tpu_custom_call.1} parent=1 // pred_check
      _
    $region47: #{tpu_custom_call.1} parent=1 // pred_check_branch
      %608 = sbr.rel (0) target = $region49
    $region48: #{tpu_custom_call.1} parent=1 // pred_region
      %609 = dma.done [#allocation5], 1024
    $region49: #{tpu_custom_call.1} parent=1 // pred_fallthru
      _
    %610 = vsyncpa [#allocation4], 1
    %611 = vsyncpa [#allocation7], 1
    %612 = vsyncpa [#allocation5], 1

</llo_original>
